<compile_context>
chip_gen: v6e
topology: v6e:2x2x1
jax: 0.10.0
libtpu: 0.0.40
codegen_flags: <defaults>
</compile_context>

<pallas_src>
import jax
import jax.numpy as jnp
from jax.experimental import pallas as pl
from jax.experimental.pallas import tpu as pltpu

BN_EPS = 1e-5


def _bn_stats_kernel(xd_ref, sum_ref, ssq_ref):
    # Accumulate partial sums / sums-of-squares per lane into resident outputs.
    @pl.when(pl.program_id(0) == 0)
    def _init():
        sum_ref[...] = jnp.zeros_like(sum_ref)
        ssq_ref[...] = jnp.zeros_like(ssq_ref)

    x = xd_ref[...].astype(jnp.float32)
    sum_ref[...] += jnp.sum(x, axis=0, keepdims=True)
    ssq_ref[...] += jnp.sum(x * x, axis=0, keepdims=True)


def _bn_apply_kernel(xd_ref, scale_ref, shift_ref, od_ref):
    # Pure lane-dense FMA: y = x * (gamma*rstd) + (beta - mean*gamma*rstd).
    od_ref[...] = (
        xd_ref[...].astype(jnp.float32) * scale_ref[...] + shift_ref[...]
    ).astype(od_ref.dtype)


def edge_embedding_forward(x, gamma, beta, *, eps=BN_EPS, block_rows=1024):
    """Training-mode BatchNorm1d(n_feats) forward. x: (N, F); gamma/beta: (F,)."""
    N, F = x.shape

    # Pack `pack` consecutive rows into one 128-lane row (lane-dense view).
    pack = 128 // F if (F <= 128 and 128 % F == 0) else 1
    W = pack * F

    # Pad N so the batch reshapes to (R, W) and tiles evenly. Padded rows are
    # zeros, so they contribute nothing to the sums; we divide by the true N.
    N_min = pl.cdiv(N, pack) * pack
    R_min = N_min // pack
    if R_min <= block_rows:
        tile_r, num_tiles = R_min, 1
        N_pad = N_min
    else:
        tile_r = block_rows                      # multiple of 8 by construction
        num_tiles = pl.cdiv(R_min, tile_r)
        N_pad = num_tiles * tile_r * pack

    x_p = x if N_pad == N else jnp.pad(x, ((0, N_pad - N), (0, 0)))
    R = N_pad // pack
    xd = x_p.reshape(R, W)                       # lane-dense slab of the batch

    # ---- pass 1: tiled accumulation of sum and sum-of-squares ----
    sums, ssqs = pl.pallas_call(
        _bn_stats_kernel,
        out_shape=(jax.ShapeDtypeStruct((1, W), jnp.float32),
                   jax.ShapeDtypeStruct((1, W), jnp.float32)),
        grid=(num_tiles,),
        in_specs=[pl.BlockSpec((tile_r, W), lambda i: (i, 0))],
        out_specs=(pl.BlockSpec((1, W), lambda i: (0, 0)),
                   pl.BlockSpec((1, W), lambda i: (0, 0))),
        compiler_params=pltpu.CompilerParams(
            dimension_semantics=("arbitrary",)),
    )(xd)

    # ---- tiny O(F) epilogue in XLA: fold lane groups, finish BN parameters ----
    sum_f = jnp.sum(sums.reshape(pack, F), axis=0)
    ssq_f = jnp.sum(ssqs.reshape(pack, F), axis=0)
    mean = sum_f / N
    var = ssq_f / N - mean * mean                # biased variance (training mode)
    rstd = jax.lax.rsqrt(var + eps)
    scale = gamma.astype(jnp.float32) * rstd     # (F,)
    shift = beta.astype(jnp.float32) - mean * scale
    scale_d = jnp.tile(scale, pack).reshape(1, W)
    shift_d = jnp.tile(shift, pack).reshape(1, W)

    # ---- pass 2: normalize, tiled + pipelined over N, megacore parallel ----
    od = pl.pallas_call(
        _bn_apply_kernel,
        out_shape=jax.ShapeDtypeStruct((R, W), x.dtype),
        grid=(num_tiles,),
        in_specs=[pl.BlockSpec((tile_r, W), lambda i: (i, 0)),
                  pl.BlockSpec((1, W), lambda i: (0, 0)),
                  pl.BlockSpec((1, W), lambda i: (0, 0))],
        out_specs=pl.BlockSpec((tile_r, W), lambda i: (i, 0)),
        compiler_params=pltpu.CompilerParams(
            dimension_semantics=("parallel",)),
    )(xd, scale_d, shift_d)

    return od.reshape(N_pad, F)[:N]


def reference(x, gamma, beta, eps=BN_EPS):
    """Pure-JAX reference matching PyTorch BatchNorm1d training-mode forward."""
    mean = jnp.mean(x, axis=0)
    var = jnp.mean((x - mean) ** 2, axis=0)      # biased variance
    return (x - mean) * jax.lax.rsqrt(var + eps) * gamma + beta


if __name__ == "__main__":
    key = jax.random.PRNGKey(0)
    kx, kg, kb, kx2 = jax.random.split(key, 4)

    # Small shapes implied by the module: a batch of edges with n_feats features.
    N, n_feats = 64, 16
    x = jax.random.normal(kx, (N, n_feats), dtype=jnp.float32)
    gamma = 1.0 + 0.1 * jax.random.normal(kg, (n_feats,), dtype=jnp.float32)
    beta = 0.1 * jax.random.normal(kb, (n_feats,), dtype=jnp.float32)

    out = jax.block_until_ready(edge_embedding_forward(x, gamma, beta))
    ref = reference(x, gamma, beta)
    assert out.shape == (N, n_feats), out.shape
    assert jnp.allclose(out, ref, atol=1e-4, rtol=1e-4), "mismatch vs reference (single tile)"

    # Also exercise the multi-tile + padded-row path (exact batch stats must hold).
    N2 = 300
    x2 = jax.random.normal(kx2, (N2, n_feats), dtype=jnp.float32)
    out2 = jax.block_until_ready(
        edge_embedding_forward(x2, gamma, beta, block_rows=16))
    ref2 = reference(x2, gamma, beta)
    assert out2.shape == (N2, n_feats), out2.shape
    assert jnp.allclose(out2, ref2, atol=1e-4, rtol=1e-4), "mismatch vs reference (tiled)"

    print("KERNEL_OK")
</pallas_src>

<mosaic_0001>
module attributes {stable_mosaic.version = 11 : i64} {
  func.func @_bn_stats_kernel(%arg0: i32, %arg1: memref<8x128xf32, #tpu.memory_space<vmem>>, %arg2: memref<1x128xf32, #tpu.memory_space<vmem>>, %arg3: memref<1x128xf32, #tpu.memory_space<vmem>>) attributes {dimension_semantics = [#tpu.dimension_semantics<arbitrary>], iteration_bounds = array<i64: 1>, scalar_prefetch = 0 : i64, scratch_operands = 0 : i64, tpu.core_type = #tpu.core_type<tc>, window_params = [{transform_indices = @transform_0, window_bounds = array<i64: 8, 128>}, {pipeline_mode = #tpu.pipeline_mode<synchronous>, transform_indices = @transform_1, window_bounds = array<i64: 1, 128>}, {pipeline_mode = #tpu.pipeline_mode<synchronous>, transform_indices = @transform_2, window_bounds = array<i64: 1, 128>}]} {
    %c0_i32 = arith.constant 0 : i32
    %0 = arith.cmpi eq, %arg0, %c0_i32 : i32
    %1 = arith.extui %0 : i1 to i32
    %c0_i32_0 = arith.constant 0 : i32
    %2 = arith.cmpi ne, %1, %c0_i32_0 : i32
    scf.if %2 {
      %cst_11 = arith.constant 0.000000e+00 : f32
      %15 = vector.broadcast %cst_11 : f32 to vector<1x128xf32>
      %c0_12 = arith.constant 0 : index
      %c0_13 = arith.constant 0 : index
      %16 = vector.load %arg2[%c0_12, %c0_13] : memref<1x128xf32, #tpu.memory_space<vmem>>, vector<1x128xf32>
      tpu.vector_store %arg2[%c0_12, %c0_13], %15 {strides = array<i32>} : memref<1x128xf32, #tpu.memory_space<vmem>>, vector<1x128xf32>,
      %cst_14 = arith.constant 0.000000e+00 : f32
      %17 = vector.broadcast %cst_14 : f32 to vector<1x128xf32>
      %c0_15 = arith.constant 0 : index
      %c0_16 = arith.constant 0 : index
      %18 = vector.load %arg3[%c0_15, %c0_16] : memref<1x128xf32, #tpu.memory_space<vmem>>, vector<1x128xf32>
      tpu.vector_store %arg3[%c0_15, %c0_16], %17 {strides = array<i32>} : memref<1x128xf32, #tpu.memory_space<vmem>>, vector<1x128xf32>,
    } else {
    }
    %c0 = arith.constant 0 : index
    %c0_1 = arith.constant 0 : index
    %3 = vector.load %arg1[%c0, %c0_1] : memref<8x128xf32, #tpu.memory_space<vmem>>, vector<8x128xf32>
    %c0_2 = arith.constant 0 : index
    %c0_3 = arith.constant 0 : index
    %4 = vector.load %arg2[%c0_2, %c0_3] : memref<1x128xf32, #tpu.memory_space<vmem>>, vector<1x128xf32>
    %cst = arith.constant dense<0.000000e+00> : vector<128xf32>
    %5 = vector.multi_reduction <add>, %3, %cst [0] : vector<8x128xf32> to vector<128xf32>
    %6 = vector.shape_cast %5 : vector<128xf32> to vector<1x128xf32>
    %7 = arith.addf %4, %6 : vector<1x128xf32>
    %c0_4 = arith.constant 0 : index
    %c0_5 = arith.constant 0 : index
    %8 = vector.load %arg2[%c0_4, %c0_5] : memref<1x128xf32, #tpu.memory_space<vmem>>, vector<1x128xf32>
    tpu.vector_store %arg2[%c0_4, %c0_5], %7 {strides = array<i32>} : memref<1x128xf32, #tpu.memory_space<vmem>>, vector<1x128xf32>,
    %c0_6 = arith.constant 0 : index
    %c0_7 = arith.constant 0 : index
    %9 = vector.load %arg3[%c0_6, %c0_7] : memref<1x128xf32, #tpu.memory_space<vmem>>, vector<1x128xf32>
    %10 = arith.mulf %3, %3 : vector<8x128xf32>
    %cst_8 = arith.constant dense<0.000000e+00> : vector<128xf32>
    %11 = vector.multi_reduction <add>, %10, %cst_8 [0] : vector<8x128xf32> to vector<128xf32>
    %12 = vector.shape_cast %11 : vector<128xf32> to vector<1x128xf32>
    %13 = arith.addf %9, %12 : vector<1x128xf32>
    %c0_9 = arith.constant 0 : index
    %c0_10 = arith.constant 0 : index
    %14 = vector.load %arg3[%c0_9, %c0_10] : memref<1x128xf32, #tpu.memory_space<vmem>>, vector<1x128xf32>
    tpu.vector_store %arg3[%c0_9, %c0_10], %13 {strides = array<i32>} : memref<1x128xf32, #tpu.memory_space<vmem>>, vector<1x128xf32>,
    return
  }
  func.func @transform_0(%arg0: i32) -> (i32, i32) {
    %c0_i32 = arith.constant 0 : i32
    %c0_i32_0 = arith.constant 0 : i32
    return %arg0, %c0_i32 : i32, i32
  }
  func.func @transform_1(%arg0: i32) -> (i32, i32) {
    %c0_i32 = arith.constant 0 : i32
    %c0_i32_0 = arith.constant 0 : i32
    %c0_i32_1 = arith.constant 0 : i32
    return %c0_i32, %c0_i32_0 : i32, i32
  }
  func.func @transform_2(%arg0: i32) -> (i32, i32) {
    %c0_i32 = arith.constant 0 : i32
    %c0_i32_0 = arith.constant 0 : i32
    %c0_i32_1 = arith.constant 0 : i32
    return %c0_i32, %c0_i32_0 : i32, i32
  }
}

</mosaic_0001>

<llo_original>
// kernel: tpu_custom_call.1
$region0: #{tpu_custom_call.1}
  #allocation0 [shape = 'u32[]', space=smem, size = 0x4, offset = 0x4, fixed_abs, tag = 'smem constant byte address 0x4 - core index']
  #allocation1 [shape = 'u32[144,128]{1,0:T(1,128)}', space=vmem, size = 0x12000, scoped, tag = 'internal scratch']
  %s0 = inlined_call_operand.hbm [shape: f32[8,128], index: 0, kind: input, shape index: {}]
  %s1 = inlined_call_operand.hbm [shape: f32[1,128], index: 1, kind: output, shape index: {0}]
  %s2 = inlined_call_operand.hbm [shape: f32[1,128], index: 2, kind: output, shape index: {1}]
  %3 = xla_tuple %s1, %s2
  %s4 = sld [smem:[#allocation0]]
  $region30: #{tpu_custom_call.1} parent=0
    _
  %s6 = ssub.s32 1, %s4
  %s7 = scalar_select 0, %s6, %s4
  $region1: #{tpu_custom_call.1} parent=0
    #allocation2 [shape = 'u8[4096]{0}', space=vmem, size = 0x1000, scoped, tag = 'input window, operand 0, single buffered']
    #allocation3 [shape = 's32[1]{0}', space=sflag, size = 0x4, scoped, tag = 'scoped memory for tpu_custom_call.1']
    #allocation4 [shape = 's32[1]{0}', space=sflag, size = 0x4, scoped, tag = 'scoped memory for tpu_custom_call.1']
    #allocation5 [shape = 'u8[512]{0}', space=vmem, size = 0x400, scoped, tag = 'output window, operand 0, single buffered']
    #allocation6 [shape = 'u8[512]{0}', space=vmem, size = 0x400, scoped, tag = 'output window, operand 1, single buffered']
    #allocation7 [shape = 's32[1]{0}', space=sflag, size = 0x4, scoped, tag = 'scoped memory for tpu_custom_call.1']
    %8 = vsyncpa [#allocation3], 0
    %9 = vsyncpa [#allocation4], 0
    %10 = vsyncpa [#allocation7], 0
    // Predicated region
    $region2: #{tpu_custom_call.1} parent=1 // pred_check
      _
    $region3: #{tpu_custom_call.1} parent=1 // pred_check_branch
      %12 = sbr.rel (0) target = $region5
    $region4: #{tpu_custom_call.1} parent=1 // pred_region
      %s14 = ssub.s32 128, 128
      %15 = vsyncadd [#allocation3], %s14
      %s17 = sshll.u32 [#allocation2], 4
      %s18 = int_to_ptr.vmem [resolvable:$true] %s17
      %20 = dma.hbm_to_vmem [thread:$0]  %s0, 128, %s18, [#allocation3]
    $region5: #{tpu_custom_call.1} parent=1 // pred_fallthru
      _
    // Predicated region
    $region6: #{tpu_custom_call.1} parent=1 // pred_check
      _
    $region7: #{tpu_custom_call.1} parent=1 // pred_check_branch
      %22 = sbr.rel (0) target = $region9
    $region8: #{tpu_custom_call.1} parent=1 // pred_region
      %23 = dma.done [#allocation3], 128
    $region9: #{tpu_custom_call.1} parent=1 // pred_fallthru
      _
    %p24 = scmp.eq.s32.totalorder 0, 0
    // Predicated region
    $region10: #{tpu_custom_call.1} parent=1 // pred_check
      %p25 = pneg %p24
    $region11: #{tpu_custom_call.1} parent=1 // pred_check_branch
      %27 = sbr.rel (%p25) target = $region13
    $region12: #{tpu_custom_call.1} parent=1 // pred_region
      %28 = vst [vmem:[#allocation5] sm:$0x1] 0.0
      %29 = vst [vmem:[#allocation6] sm:$0x1] 0.0
    $region13: #{tpu_custom_call.1} parent=1 // pred_fallthru
      _
    %v30 = vld [vmem:[#allocation2] sm:$0xff]
    %v31 = vld [vmem:[#allocation5] sm:$0x1]
    %v32 = vrot.slane %v30, 4
    %v33 = vadd.f32 %v30, %v32
    %v34 = vrot.slane %v33, 2
    %v35 = vadd.f32 %v33, %v34
    %v36 = vrot.slane %v35, 1
    %v37 = vadd.f32 %v35, %v36
    %v38 = vadd.f32 %v31, %v37
    %39 = vst [vmem:[#allocation5] sm:$0x1] %v38
    %v40 = vld [vmem:[#allocation6] sm:$0x1]
    %v41 = vmul.f32 %v30, %v30
    %v42 = vrot.slane %v41, 4
    %v43 = vadd.f32 %v41, %v42
    %v44 = vrot.slane %v43, 2
    %v45 = vadd.f32 %v43, %v44
    %v46 = vrot.slane %v45, 1
    %v47 = vadd.f32 %v45, %v46
    %v48 = vadd.f32 %v40, %v47
    %49 = vst [vmem:[#allocation6] sm:$0x1] %v48
    // Predicated region
    $region14: #{tpu_custom_call.1} parent=1 // pred_check
      _
    $region15: #{tpu_custom_call.1} parent=1 // pred_check_branch
      %51 = sbr.rel (0) target = $region17
    $region16: #{tpu_custom_call.1} parent=1 // pred_region
      %s53 = ssub.s32 16, 16
      %54 = vsyncadd [#allocation4], %s53
      %s56 = sshll.u32 [#allocation5], 4
      %s57 = int_to_ptr.vmem [resolvable:$true] %s56
      %59 = dma.vmem_to_hbm [thread:$0]  %s57, 16, %s1, [#allocation4]
    $region17: #{tpu_custom_call.1} parent=1 // pred_fallthru
      _
    // Predicated region
    $region18: #{tpu_custom_call.1} parent=1 // pred_check
      _
    $region19: #{tpu_custom_call.1} parent=1 // pred_check_branch
      %61 = sbr.rel (0) target = $region21
    $region20: #{tpu_custom_call.1} parent=1 // pred_region
      %s63 = ssub.s32 16, 16
      %64 = vsyncadd [#allocation7], %s63
      %s66 = sshll.u32 [#allocation6], 4
      %s67 = int_to_ptr.vmem [resolvable:$true] %s66
      %69 = dma.vmem_to_hbm [thread:$0]  %s67, 16, %s2, [#allocation7]
    $region21: #{tpu_custom_call.1} parent=1 // pred_fallthru
      _
    // Predicated region
    $region22: #{tpu_custom_call.1} parent=1 // pred_check
      _
    $region23: #{tpu_custom_call.1} parent=1 // pred_check_branch
      %71 = sbr.rel (0) target = $region25
    $region24: #{tpu_custom_call.1} parent=1 // pred_region
      %72 = dma.done [#allocation4], 16
    $region25: #{tpu_custom_call.1} parent=1 // pred_fallthru
      _
    // Predicated region
    $region26: #{tpu_custom_call.1} parent=1 // pred_check
      _
    $region27: #{tpu_custom_call.1} parent=1 // pred_check_branch
      %74 = sbr.rel (0) target = $region29
    $region28: #{tpu_custom_call.1} parent=1 // pred_region
      %75 = dma.done [#allocation7], 16
    $region29: #{tpu_custom_call.1} parent=1 // pred_fallthru
      _
    %76 = vsyncpa [#allocation3], 1
    %77 = vsyncpa [#allocation4], 1
    %78 = vsyncpa [#allocation7], 1

</llo_original>
